<compile_context>
chip_gen: v6e
topology: v6e:2x2x1
jax: 0.10.0
libtpu: 0.0.40
codegen_flags: <defaults>
</compile_context>

<pallas_src>
import functools

import jax
import jax.numpy as jnp
from jax.experimental import pallas as pl
from jax.experimental.pallas import tpu as pltpu


def _cdiv(a, b):
    return (a + b - 1) // b


def _round_up(a, m):
    return _cdiv(a, m) * m


# ----------------------------- detector (focal) loss -----------------------------

_DET_LANES = 512        # lane-dense last dim (multiple of 128 -> unmasked vld/vst)
_DET_BLOCK_ROWS = 256   # 256*512*4B = 512 KiB per input per buffer; 3 inputs,
                        # double-buffered ~3 MiB -> fits default scoped VMEM everywhere.


def _detector_loss_kernel(pred_ref, ht_ref, vm_ref, pos_ref, neg_ref, npos_ref):
    @pl.when(pl.program_id(0) == 0)
    def _():
        pos_ref[...] = jnp.zeros_like(pos_ref)
        neg_ref[...] = jnp.zeros_like(neg_ref)
        npos_ref[...] = jnp.zeros_like(npos_ref)

    # Cast in-kernel so bf16 / bool / uint8 inputs are read at native width from HBM.
    pred = pred_ref[...].astype(jnp.float32)
    ht = ht_ref[...].astype(jnp.float32)
    vm = vm_ref[...].astype(jnp.float32)

    eps = 1e-7
    pos_inds = (ht == 1.0).astype(jnp.float32)
    neg_inds = (ht < 1.0).astype(jnp.float32)
    neg_w = jnp.square(jnp.square(1.0 - ht))                     # (1 - ht)^4
    pos_loss = jnp.log(pred + eps) * jnp.square(1.0 - pred) * pos_inds * vm
    neg_loss = jnp.log(1.0 - pred + eps) * jnp.square(pred) * neg_w * neg_inds * vm

    pos_ref[...] += jnp.sum(pos_loss)
    neg_ref[...] += jnp.sum(neg_loss)
    npos_ref[...] += jnp.sum(pos_inds)


def detector_loss(pred, heatmap, valid_mask):
    n = pred.size
    rows = _cdiv(n, _DET_LANES)
    br = min(_DET_BLOCK_ROWS, _round_up(rows, 8))
    rows_p = _round_up(rows, br)
    total = rows_p * _DET_LANES

    def prep(x):
        flat = x.reshape(-1)
        if total > n:
            # zero padding contributes nothing: ht=0 -> not a positive, vm=0 kills both losses
            flat = jnp.pad(flat, (0, total - n))
        return flat.reshape(rows_p, _DET_LANES)

    p2, h2, v2 = prep(pred), prep(heatmap), prep(valid_mask)

    pos, neg, npos = pl.pallas_call(
        _detector_loss_kernel,
        grid=(rows_p // br,),
        in_specs=[pl.BlockSpec((br, _DET_LANES), lambda i: (i, 0))] * 3,
        out_specs=(pl.BlockSpec((1, 1), lambda i: (0, 0)),) * 3,
        out_shape=(jax.ShapeDtypeStruct((1, 1), jnp.float32),) * 3,
        compiler_params=pltpu.CompilerParams(dimension_semantics=("arbitrary",)),
    )(p2, h2, v2)

    pos, neg, npos = pos[0, 0], neg[0, 0], npos[0, 0]
    npos_safe = jnp.maximum(npos, 1.0)     # keeps the untaken branch finite (and grad-safe)
    return jnp.where(npos == 0.0, -neg, -(pos + neg) / npos_safe)


# ------------------------------- descriptor loss ---------------------------------

def _descriptor_loss_kernel(desc_ref, wdesc_ref, wpts_ref, coords_ref, vm_ref, wvm_ref,
                            out_ref, dn_sc, *, pos_margin, neg_margin, lambda_d, cell):
    i = pl.program_id(1)
    j = pl.program_id(2)
    eps = 1e-12   # F.normalize default eps

    @pl.when((i == 0) & (j == 0))
    def _():
        out_ref[...] = jnp.zeros_like(out_ref)

    # Normalize the row-descriptor tile once per i-tile (j is the innermost grid axis);
    # keep it in bf16 scratch for the MXU.  rsqrt(max(sumsq, eps^2)) == 1/max(||x||, eps).
    @pl.when(j == 0)
    def _():
        d = desc_ref[0].astype(jnp.float32)                                      # [tm, Dc]
        inv = jax.lax.rsqrt(jnp.maximum(jnp.sum(d * d, axis=-1, keepdims=True), eps * eps))
        dn_sc[...] = (d * inv).astype(jnp.bfloat16)

    wd = wdesc_ref[0].astype(jnp.float32)                                        # [tn, Dc]
    inv_w = jax.lax.rsqrt(jnp.maximum(jnp.sum(wd * wd, axis=-1, keepdims=True), eps * eps))
    wn = (wd * inv_w).astype(jnp.bfloat16)

    # dot[r, c] = <desc[r, :], warped_desc[c, :]>, bf16 MXU inputs, f32 accumulation.
    dot = jax.lax.dot_general(dn_sc[...], wn, (((1,), (1,)), ((), ())),
                              preferred_element_type=jnp.float32)                # [tm, tn]
    dot = jnp.maximum(dot, 0.0)                                                  # F.relu

    # Correspondence mask s computed on the fly (no [B, N, N] tensor in HBM).
    wpts = wpts_ref[0]                                                           # [tm, 2] (y, x)
    dy = wpts[:, 0:1] - coords_ref[0:1, :]                                       # [tm, tn]
    dx = wpts[:, 1:2] - coords_ref[1:2, :]
    s = ((dy * dy + dx * dx) <= (cell - 0.5) ** 2).astype(jnp.float32)

    valid = vm_ref[0] * wvm_ref[0]                                               # [tm,1]*[1,tn]
    pos = jnp.maximum(pos_margin - dot, 0.0)
    neg = jnp.maximum(dot - neg_margin, 0.0)
    out_ref[...] += jnp.sum((lambda_d * s * pos + (1.0 - s) * neg) * valid)


def _warp_points_batch(Hmat, points_yx):
    # TODO(synk): warp_points_bacth source not provided; standard SuperPoint
    # (y, x) <-> (x, y) homography warp assumed.
    pts_xy = points_yx[:, ::-1]                                                  # [N, 2] (x, y)
    homog = jnp.concatenate(
        [pts_xy, jnp.ones((pts_xy.shape[0], 1), pts_xy.dtype)], axis=-1)         # [N, 3]
    warped = jnp.einsum('bij,nj->bni', Hmat, homog)                              # [B, N, 3]
    warped = warped[..., :2] / warped[..., 2:3]
    return warped[..., ::-1]                                                     # back to (y, x)


def _bilinear_downsample(x, cell):
    # F.interpolate(x[:, None], scale_factor=1/cell, mode='bilinear', align_corners=False)
    B, H, W = x.shape
    out_h, out_w = H // cell, W // cell

    def src(o, size):
        s = (jnp.arange(o, dtype=jnp.float32) + 0.5) * cell - 0.5
        s = jnp.maximum(s, 0.0)
        i0 = jnp.clip(jnp.floor(s).astype(jnp.int32), 0, size - 1)
        i1 = jnp.clip(i0 + 1, 0, size - 1)
        w1 = s - i0.astype(jnp.float32)
        return i0, i1, w1

    y0, y1, wy = src(out_h, H)
    x0, x1, wx = src(out_w, W)
    rows0 = x[:, y0, :]
    rows1 = x[:, y1, :]
    top = rows0[:, :, x0] * (1.0 - wx)[None, None, :] + rows0[:, :, x1] * wx[None, None, :]
    bot = rows1[:, :, x0] * (1.0 - wx)[None, None, :] + rows1[:, :, x1] * wx[None, None, :]
    return top * (1.0 - wy)[None, :, None] + bot * wy[None, :, None]


def descriptor_loss(descriptors, warped_descriptors, homographies,
                    valid_mask, warped_valid_mask, config):
    B, Dc, Hc, Wc = descriptors.shape
    cell = int(config['cell'])
    N = Hc * Wc

    # ---- tiny XLA glue: cell centers, homography warp, valid-mask downsample ----
    ys, xs = jnp.meshgrid(jnp.arange(Hc), jnp.arange(Wc), indexing='ij')
    coords = (jnp.stack([ys, xs], axis=0).astype(jnp.float32) * cell
              + cell // 2).reshape(2, N)                                         # [2, N] (y; x)

    Hmat = jnp.squeeze(homographies, axis=1).astype(jnp.float32)                 # [B, 3, 3]
    warped_pts = _warp_points_batch(Hmat, coords.T)                              # [B, N, 2]

    normalization = jnp.sum(warped_valid_mask.astype(jnp.float32))

    vm_small = (_bilinear_downsample(valid_mask.astype(jnp.float32), cell) > 0.5)
    wvm_small = (_bilinear_downsample(warped_valid_mask.astype(jnp.float32), cell) > 0.5)
    vm_small = vm_small.astype(jnp.float32).reshape(B, N, 1)                     # row-side
    wvm_small = wvm_small.astype(jnp.float32).reshape(B, 1, N)                   # column-side

    # NCHW -> [B, N, Dc]; dtype kept native, normalization/cast happen in-kernel.
    desc = jnp.transpose(descriptors, (0, 2, 3, 1)).reshape(B, N, Dc)
    wdesc = jnp.transpose(warped_descriptors, (0, 2, 3, 1)).reshape(B, N, Dc)

    # correspondence tile size: 256 matches the v6e/v7x MXU, 128 the v5e MXU
    if N % 256 == 0:
        t = 256
    elif N % 128 == 0:
        t = 128
    else:
        t = N       # TODO(synk): pad N to a tile multiple for tilings that do not divide evenly
    g = N // t

    kernel = functools.partial(
        _descriptor_loss_kernel,
        pos_margin=float(config['train']['positive_margin']),
        neg_margin=float(config['train']['negative_margin']),
        lambda_d=float(config['train']['lambda_d']),
        cell=float(cell))

    per_batch = pl.pallas_call(
        kernel,
        grid=(B, g, g),
        in_specs=[
            pl.BlockSpec((1, t, Dc), lambda b, i, j: (b, i, 0)),   # descriptors (rows)
            pl.BlockSpec((1, t, Dc), lambda b, i, j: (b, j, 0)),   # warped descriptors (cols)
            pl.BlockSpec((1, t, 2), lambda b, i, j: (b, i, 0)),    # warped cell centers (rows)
            pl.BlockSpec((2, t), lambda b, i, j: (0, j)),          # cell centers (cols)
            pl.BlockSpec((1, t, 1), lambda b, i, j: (b, i, 0)),    # valid mask (rows)
            pl.BlockSpec((1, 1, t), lambda b, i, j: (b, 0, j)),    # warped valid mask (cols)
        ],
        out_specs=pl.BlockSpec((1, 1, 1), lambda b, i, j: (b, 0, 0)),
        out_shape=jax.ShapeDtypeStruct((B, 1, 1), jnp.float32),
        scratch_shapes=[pltpu.VMEM((t, Dc), jnp.bfloat16)],
        compiler_params=pltpu.CompilerParams(
            dimension_semantics=("parallel", "arbitrary", "arbitrary")),
    )(desc, wdesc, warped_pts, coords, vm_small, wvm_small)

    return jnp.sum(per_batch) / normalization


# --------------------------------- module ----------------------------------------

class SuperPointLoss:
    """Loss for SuperPoint: detector (focal) loss + optional descriptor loss."""

    def __init__(self, config):
        self.config = config

    def __call__(self, inputs, outputs):
        loss = detector_loss(outputs['outputs']['prob'], inputs['ht'], inputs['valid_mask'])
        loss_dict = {'points_loss': loss}
        if 'warped_image' in inputs:
            warped_loss = detector_loss(outputs['warped_outputs']['prob'],
                                        inputs['warped_ht'], inputs['warped_valid_mask'])
            loss_dict['warped_points_loss'] = warped_loss
            loss = loss + warped_loss
            if self.config['train']['add_descriptor']:
                d_loss = descriptor_loss(outputs['outputs']['desc_raw'],
                                         outputs['warped_outputs']['desc_raw'],
                                         inputs['H'], inputs['valid_mask'],
                                         inputs['warped_valid_mask'], self.config)
                loss_dict['descriptor_loss'] = d_loss
                loss = loss + self.config['train']['lambda_loss'] * d_loss
        return loss, loss_dict


# --------------------------------- demo -------------------------------------------

if __name__ == "__main__":
    key = jax.random.PRNGKey(0)
    B, H, W, cell, Dc = 2, 32, 32, 8, 32
    Hc, Wc = H // cell, W // cell

    config = {
        'cell': cell,
        'train': {
            'positive_margin': 1.0,
            'negative_margin': 0.2,
            'lambda_d': 250.0,
            'lambda_loss': 1e-4,
            'add_descriptor': True,
        },
    }

    ks = jax.random.split(key, 8)
    prob = jax.nn.sigmoid(jax.random.normal(ks[0], (B, H, W), jnp.float32))
    wprob = jax.nn.sigmoid(jax.random.normal(ks[1], (B, H, W), jnp.float32))
    ht = (jax.random.uniform(ks[2], (B, H, W)) > 0.98).astype(jnp.float32)
    ht = jnp.maximum(ht, 0.3 * jax.random.uniform(ks[3], (B, H, W)))   # keypoints stay exactly 1.0
    wht = (jax.random.uniform(ks[4], (B, H, W)) > 0.98).astype(jnp.float32)
    valid_mask = jnp.ones((B, H, W), jnp.float32)
    warped_valid_mask = jnp.ones((B, H, W), jnp.float32).at[:, :4, :].set(0.0)

    desc_raw = jax.random.normal(ks[5], (B, Dc, Hc, Wc), jnp.float32)
    wdesc_raw = jax.random.normal(ks[6], (B, Dc, Hc, Wc), jnp.float32)

    # near-identity homographies, shape [B, 1, 3, 3]
    pert = 0.01 * jax.random.normal(ks[7], (B, 3, 3), jnp.float32)
    Hmat = (jnp.eye(3, dtype=jnp.float32)[None] + pert)
    Hmat = Hmat.at[:, 2, 2].set(1.0)[:, None]

    inputs = {
        'ht': ht,
        'valid_mask': valid_mask,
        'warped_image': jnp.zeros((B, 1, H, W), jnp.float32),
        'warped_ht': wht,
        'warped_valid_mask': warped_valid_mask,
        'H': Hmat,
    }
    outputs = {
        'outputs': {'prob': prob, 'desc_raw': desc_raw},
        'warped_outputs': {'prob': wprob, 'desc_raw': wdesc_raw},
    }

    loss_fn = SuperPointLoss(config)
    loss, loss_dict = loss_fn(inputs, outputs)
    jax.block_until_ready(loss)
    print("KERNEL_OK")
</pallas_src>

<mosaic_0001>
module attributes {stable_mosaic.version = 11 : i64} {
  func.func @_detector_loss_kernel(%arg0: i32, %arg1: memref<8x512xf32, #tpu.memory_space<vmem>>, %arg2: memref<8x512xf32, #tpu.memory_space<vmem>>, %arg3: memref<8x512xf32, #tpu.memory_space<vmem>>, %arg4: memref<1x1xf32, #tpu.memory_space<vmem>>, %arg5: memref<1x1xf32, #tpu.memory_space<vmem>>, %arg6: memref<1x1xf32, #tpu.memory_space<vmem>>) attributes {dimension_semantics = [#tpu.dimension_semantics<arbitrary>], iteration_bounds = array<i64: 1>, scalar_prefetch = 0 : i64, scratch_operands = 0 : i64, tpu.core_type = #tpu.core_type<tc>, window_params = [{transform_indices = @transform_0, window_bounds = array<i64: 8, 512>}, {transform_indices = @transform_1, window_bounds = array<i64: 8, 512>}, {transform_indices = @transform_2, window_bounds = array<i64: 8, 512>}, {pipeline_mode = #tpu.pipeline_mode<synchronous>, transform_indices = @transform_3, window_bounds = array<i64: 1, 1>}, {pipeline_mode = #tpu.pipeline_mode<synchronous>, transform_indices = @transform_4, window_bounds = array<i64: 1, 1>}, {pipeline_mode = #tpu.pipeline_mode<synchronous>, transform_indices = @transform_5, window_bounds = array<i64: 1, 1>}]} {
    %c0_i32 = arith.constant 0 : i32
    %0 = arith.cmpi eq, %arg0, %c0_i32 : i32
    %1 = arith.extui %0 : i1 to i32
    %c0_i32_0 = arith.constant 0 : i32
    %2 = arith.cmpi ne, %1, %c0_i32_0 : i32
    scf.if %2 {
      %cst_27 = arith.constant 0.000000e+00 : f32
      %61 = vector.broadcast %cst_27 : f32 to vector<1x1xf32>
      %c0_28 = arith.constant 0 : index
      %c0_29 = arith.constant 0 : index
      %62 = vector.load %arg4[%c0_28, %c0_29] : memref<1x1xf32, #tpu.memory_space<vmem>>, vector<1x1xf32>
      tpu.vector_store %arg4[%c0_28, %c0_29], %61 {strides = array<i32>} : memref<1x1xf32, #tpu.memory_space<vmem>>, vector<1x1xf32>,
      %cst_30 = arith.constant 0.000000e+00 : f32
      %63 = vector.broadcast %cst_30 : f32 to vector<1x1xf32>
      %c0_31 = arith.constant 0 : index
      %c0_32 = arith.constant 0 : index
      %64 = vector.load %arg5[%c0_31, %c0_32] : memref<1x1xf32, #tpu.memory_space<vmem>>, vector<1x1xf32>
      tpu.vector_store %arg5[%c0_31, %c0_32], %63 {strides = array<i32>} : memref<1x1xf32, #tpu.memory_space<vmem>>, vector<1x1xf32>,
      %cst_33 = arith.constant 0.000000e+00 : f32
      %65 = vector.broadcast %cst_33 : f32 to vector<1x1xf32>
      %c0_34 = arith.constant 0 : index
      %c0_35 = arith.constant 0 : index
      %66 = vector.load %arg6[%c0_34, %c0_35] : memref<1x1xf32, #tpu.memory_space<vmem>>, vector<1x1xf32>
      tpu.vector_store %arg6[%c0_34, %c0_35], %65 {strides = array<i32>} : memref<1x1xf32, #tpu.memory_space<vmem>>, vector<1x1xf32>,
    } else {
    }
    %c0 = arith.constant 0 : index
    %c0_1 = arith.constant 0 : index
    %3 = vector.load %arg1[%c0, %c0_1] : memref<8x512xf32, #tpu.memory_space<vmem>>, vector<8x512xf32>
    %c0_2 = arith.constant 0 : index
    %c0_3 = arith.constant 0 : index
    %4 = vector.load %arg2[%c0_2, %c0_3] : memref<8x512xf32, #tpu.memory_space<vmem>>, vector<8x512xf32>
    %c0_4 = arith.constant 0 : index
    %c0_5 = arith.constant 0 : index
    %5 = vector.load %arg3[%c0_4, %c0_5] : memref<8x512xf32, #tpu.memory_space<vmem>>, vector<8x512xf32>
    %cst = arith.constant 1.000000e+00 : f32
    %6 = vector.broadcast %cst : f32 to vector<8x512xf32>
    %7 = arith.cmpf oeq, %4, %6 : vector<8x512xf32>
    %8 = arith.extui %7 : vector<8x512xi1> to vector<8x512xi32>
    %9 = arith.sitofp %8 : vector<8x512xi32> to vector<8x512xf32>
    %cst_6 = arith.constant 1.000000e+00 : f32
    %10 = vector.broadcast %cst_6 : f32 to vector<8x512xf32>
    %11 = arith.cmpf olt, %4, %10 : vector<8x512xf32>
    %12 = arith.extui %11 : vector<8x512xi1> to vector<8x512xi32>
    %13 = arith.sitofp %12 : vector<8x512xi32> to vector<8x512xf32>
    %cst_7 = arith.constant 1.000000e+00 : f32
    %14 = vector.broadcast %cst_7 : f32 to vector<8x512xf32>
    %15 = arith.subf %14, %4 : vector<8x512xf32>
    %16 = arith.mulf %15, %15 : vector<8x512xf32>
    %17 = arith.mulf %16, %16 : vector<8x512xf32>
    %cst_8 = arith.constant 1.000000e-07 : f32
    %18 = vector.broadcast %cst_8 : f32 to vector<8x512xf32>
    %19 = arith.addf %3, %18 : vector<8x512xf32>
    %20 = math.log %19 : vector<8x512xf32>
    %cst_9 = arith.constant 1.000000e+00 : f32
    %21 = vector.broadcast %cst_9 : f32 to vector<8x512xf32>
    %22 = arith.subf %21, %3 : vector<8x512xf32>
    %23 = arith.mulf %22, %22 : vector<8x512xf32>
    %24 = arith.mulf %20, %23 : vector<8x512xf32>
    %25 = arith.mulf %24, %9 : vector<8x512xf32>
    %26 = arith.mulf %25, %5 : vector<8x512xf32>
    %cst_10 = arith.constant 1.000000e+00 : f32
    %27 = vector.broadcast %cst_10 : f32 to vector<8x512xf32>
    %28 = arith.subf %27, %3 : vector<8x512xf32>
    %cst_11 = arith.constant 1.000000e-07 : f32
    %29 = vector.broadcast %cst_11 : f32 to vector<8x512xf32>
    %30 = arith.addf %28, %29 : vector<8x512xf32>
    %31 = math.log %30 : vector<8x512xf32>
    %32 = arith.mulf %3, %3 : vector<8x512xf32>
    %33 = arith.mulf %31, %32 : vector<8x512xf32>
    %34 = arith.mulf %33, %17 : vector<8x512xf32>
    %35 = arith.mulf %34, %13 : vector<8x512xf32>
    %36 = arith.mulf %35, %5 : vector<8x512xf32>
    %c0_12 = arith.constant 0 : index
    %c0_13 = arith.constant 0 : index
    %37 = vector.load %arg4[%c0_12, %c0_13] : memref<1x1xf32, #tpu.memory_space<vmem>>, vector<1x1xf32>
    %38 = vector.shape_cast %26 : vector<8x512xf32> to vector<1x8x512xf32>
    %cst_14 = arith.constant dense<0.000000e+00> : vector<1xf32>
    %39 = vector.multi_reduction <add>, %38, %cst_14 [1, 2] : vector<1x8x512xf32> to vector<1xf32>
    %40 = vector.shape_cast %39 : vector<1xf32> to vector<1x1x1xf32>
    %41 = vector.extract %40[0, 0, 0] : f32 from vector<1x1x1xf32>
    %42 = vector.broadcast %41 : f32 to vector<1x1xf32>
    %43 = arith.addf %37, %42 : vector<1x1xf32>
    %c0_15 = arith.constant 0 : index
    %c0_16 = arith.constant 0 : index
    %44 = vector.load %arg4[%c0_15, %c0_16] : memref<1x1xf32, #tpu.memory_space<vmem>>, vector<1x1xf32>
    tpu.vector_store %arg4[%c0_15, %c0_16], %43 {strides = array<i32>} : memref<1x1xf32, #tpu.memory_space<vmem>>, vector<1x1xf32>,
    %c0_17 = arith.constant 0 : index
    %c0_18 = arith.constant 0 : index
    %45 = vector.load %arg5[%c0_17, %c0_18] : memref<1x1xf32, #tpu.memory_space<vmem>>, vector<1x1xf32>
    %46 = vector.shape_cast %36 : vector<8x512xf32> to vector<1x8x512xf32>
    %cst_19 = arith.constant dense<0.000000e+00> : vector<1xf32>
    %47 = vector.multi_reduction <add>, %46, %cst_19 [1, 2] : vector<1x8x512xf32> to vector<1xf32>
    %48 = vector.shape_cast %47 : vector<1xf32> to vector<1x1x1xf32>
    %49 = vector.extract %48[0, 0, 0] : f32 from vector<1x1x1xf32>
    %50 = vector.broadcast %49 : f32 to vector<1x1xf32>
    %51 = arith.addf %45, %50 : vector<1x1xf32>
    %c0_20 = arith.constant 0 : index
    %c0_21 = arith.constant 0 : index
    %52 = vector.load %arg5[%c0_20, %c0_21] : memref<1x1xf32, #tpu.memory_space<vmem>>, vector<1x1xf32>
    tpu.vector_store %arg5[%c0_20, %c0_21], %51 {strides = array<i32>} : memref<1x1xf32, #tpu.memory_space<vmem>>, vector<1x1xf32>,
    %c0_22 = arith.constant 0 : index
    %c0_23 = arith.constant 0 : index
    %53 = vector.load %arg6[%c0_22, %c0_23] : memref<1x1xf32, #tpu.memory_space<vmem>>, vector<1x1xf32>
    %54 = vector.shape_cast %9 : vector<8x512xf32> to vector<1x8x512xf32>
    %cst_24 = arith.constant dense<0.000000e+00> : vector<1xf32>
    %55 = vector.multi_reduction <add>, %54, %cst_24 [1, 2] : vector<1x8x512xf32> to vector<1xf32>
    %56 = vector.shape_cast %55 : vector<1xf32> to vector<1x1x1xf32>
    %57 = vector.extract %56[0, 0, 0] : f32 from vector<1x1x1xf32>
    %58 = vector.broadcast %57 : f32 to vector<1x1xf32>
    %59 = arith.addf %53, %58 : vector<1x1xf32>
    %c0_25 = arith.constant 0 : index
    %c0_26 = arith.constant 0 : index
    %60 = vector.load %arg6[%c0_25, %c0_26] : memref<1x1xf32, #tpu.memory_space<vmem>>, vector<1x1xf32>
    tpu.vector_store %arg6[%c0_25, %c0_26], %59 {strides = array<i32>} : memref<1x1xf32, #tpu.memory_space<vmem>>, vector<1x1xf32>,
    return
  }
  func.func @transform_0(%arg0: i32) -> (i32, i32) {
    %c0_i32 = arith.constant 0 : i32
    %c0_i32_0 = arith.constant 0 : i32
    return %arg0, %c0_i32 : i32, i32
  }
  func.func @transform_1(%arg0: i32) -> (i32, i32) {
    %c0_i32 = arith.constant 0 : i32
    %c0_i32_0 = arith.constant 0 : i32
    return %arg0, %c0_i32 : i32, i32
  }
  func.func @transform_2(%arg0: i32) -> (i32, i32) {
    %c0_i32 = arith.constant 0 : i32
    %c0_i32_0 = arith.constant 0 : i32
    return %arg0, %c0_i32 : i32, i32
  }
  func.func @transform_3(%arg0: i32) -> (i32, i32) {
    %c0_i32 = arith.constant 0 : i32
    %c0_i32_0 = arith.constant 0 : i32
    %c0_i32_1 = arith.constant 0 : i32
    return %c0_i32, %c0_i32_0 : i32, i32
  }
  func.func @transform_4(%arg0: i32) -> (i32, i32) {
    %c0_i32 = arith.constant 0 : i32
    %c0_i32_0 = arith.constant 0 : i32
    %c0_i32_1 = arith.constant 0 : i32
    return %c0_i32, %c0_i32_0 : i32, i32
  }
  func.func @transform_5(%arg0: i32) -> (i32, i32) {
    %c0_i32 = arith.constant 0 : i32
    %c0_i32_0 = arith.constant 0 : i32
    %c0_i32_1 = arith.constant 0 : i32
    return %c0_i32, %c0_i32_0 : i32, i32
  }
}

</mosaic_0001>

<llo_original>
// kernel: tpu_custom_call.1
$region0: #{tpu_custom_call.1}
  #allocation0 [shape = 'u32[]', space=smem, size = 0x4, offset = 0x4, fixed_abs, tag = 'smem constant byte address 0x4 - core index']
  #allocation1 [shape = 'u32[144,128]{1,0:T(1,128)}', space=vmem, size = 0x12000, scoped, tag = 'internal scratch']
  %s0 = inlined_call_operand.hbm [shape: f32[8,512], index: 0, kind: input, shape index: {}]
  %s1 = inlined_call_operand.hbm [shape: f32[8,512], index: 1, kind: input, shape index: {}]
  %s2 = inlined_call_operand.hbm [shape: f32[8,512], index: 2, kind: input, shape index: {}]
  %s3 = inlined_call_operand.hbm [shape: f32[1,1], index: 3, kind: output, shape index: {0}]
  %s4 = inlined_call_operand.hbm [shape: f32[1,1], index: 4, kind: output, shape index: {1}]
  %s5 = inlined_call_operand.hbm [shape: f32[1,1], index: 5, kind: output, shape index: {2}]
  %6 = xla_tuple %s3, %s4, %s5
  %s7 = sld [smem:[#allocation0]]
  $region54: #{tpu_custom_call.1} parent=0
    _
  %s9 = ssub.s32 1, %s7
  %s10 = scalar_select 0, %s9, %s7
  $region1: #{tpu_custom_call.1} parent=0
    #allocation2 [shape = 'u8[16384]{0}', space=vmem, size = 0x4000, scoped, tag = 'input window, operand 0, single buffered']
    #allocation3 [shape = 's32[1]{0}', space=sflag, size = 0x4, scoped, tag = 'scoped memory for tpu_custom_call.1']
    #allocation4 [shape = 's32[1]{0}', space=sflag, size = 0x4, scoped, tag = 'scoped memory for tpu_custom_call.1']
    #allocation5 [shape = 'u8[16384]{0}', space=vmem, size = 0x4000, scoped, tag = 'input window, operand 1, single buffered']
    #allocation6 [shape = 's32[1]{0}', space=sflag, size = 0x4, scoped, tag = 'scoped memory for tpu_custom_call.1']
    #allocation7 [shape = 'u8[16384]{0}', space=vmem, size = 0x4000, scoped, tag = 'input window, operand 2, single buffered']
    #allocation8 [shape = 'u8[512]{0}', space=vmem, size = 0x400, scoped, tag = 'output window, operand 0, single buffered']
    #allocation9 [shape = 'u8[512]{0}', space=vmem, size = 0x400, scoped, tag = 'output window, operand 1, single buffered']
    #allocation10 [shape = 's32[1]{0}', space=sflag, size = 0x4, scoped, tag = 'scoped memory for tpu_custom_call.1']
    #allocation11 [shape = 'u8[512]{0}', space=vmem, size = 0x400, scoped, tag = 'output window, operand 2, single buffered']
    %11 = vsyncpa [#allocation3], 0
    %12 = vsyncpa [#allocation6], 0
    %13 = vsyncpa [#allocation4], 0
    %14 = vsyncpa [#allocation10], 0
    // Predicated region
    $region2: #{tpu_custom_call.1} parent=1 // pred_check
      _
    $region3: #{tpu_custom_call.1} parent=1 // pred_check_branch
      %16 = sbr.rel (0) target = $region5
    $region4: #{tpu_custom_call.1} parent=1 // pred_region
      %s18 = ssub.s32 512, 512
      %19 = vsyncadd [#allocation3], %s18
      %s21 = sshll.u32 [#allocation2], 4
      %s22 = int_to_ptr.vmem [resolvable:$true] %s21
      %24 = dma.hbm_to_vmem [thread:$0]  %s0, 512, %s22, [#allocation3]
    $region5: #{tpu_custom_call.1} parent=1 // pred_fallthru
      _
    // Predicated region
    $region6: #{tpu_custom_call.1} parent=1 // pred_check
      _
    $region7: #{tpu_custom_call.1} parent=1 // pred_check_branch
      %26 = sbr.rel (0) target = $region9
    $region8: #{tpu_custom_call.1} parent=1 // pred_region
      %s28 = ssub.s32 512, 512
      %29 = vsyncadd [#allocation6], %s28
      %s31 = sshll.u32 [#allocation5], 4
      %s32 = int_to_ptr.vmem [resolvable:$true] %s31
      %34 = dma.hbm_to_vmem [thread:$0]  %s1, 512, %s32, [#allocation6]
    $region9: #{tpu_custom_call.1} parent=1 // pred_fallthru
      _
    // Predicated region
    $region10: #{tpu_custom_call.1} parent=1 // pred_check
      _
    $region11: #{tpu_custom_call.1} parent=1 // pred_check_branch
      %36 = sbr.rel (0) target = $region13
    $region12: #{tpu_custom_call.1} parent=1 // pred_region
      %s38 = ssub.s32 512, 512
      %39 = vsyncadd [#allocation6], %s38
      %s41 = sshll.u32 [#allocation7], 4
      %s42 = int_to_ptr.vmem [resolvable:$true] %s41
      %44 = dma.hbm_to_vmem [thread:$0]  %s2, 512, %s42, [#allocation6]
    $region13: #{tpu_custom_call.1} parent=1 // pred_fallthru
      _
    // Predicated region
    $region14: #{tpu_custom_call.1} parent=1 // pred_check
      _
    $region15: #{tpu_custom_call.1} parent=1 // pred_check_branch
      %46 = sbr.rel (0) target = $region17
    $region16: #{tpu_custom_call.1} parent=1 // pred_region
      %47 = dma.done [#allocation3], 512
    $region17: #{tpu_custom_call.1} parent=1 // pred_fallthru
      _
    // Predicated region
    $region18: #{tpu_custom_call.1} parent=1 // pred_check
      _
    $region19: #{tpu_custom_call.1} parent=1 // pred_check_branch
      %49 = sbr.rel (0) target = $region21
    $region20: #{tpu_custom_call.1} parent=1 // pred_region
      %50 = dma.done [#allocation6], 512
    $region21: #{tpu_custom_call.1} parent=1 // pred_fallthru
      _
    // Predicated region
    $region22: #{tpu_custom_call.1} parent=1 // pred_check
      _
    $region23: #{tpu_custom_call.1} parent=1 // pred_check_branch
      %52 = sbr.rel (0) target = $region25
    $region24: #{tpu_custom_call.1} parent=1 // pred_region
      %53 = dma.done [#allocation6], 512
    $region25: #{tpu_custom_call.1} parent=1 // pred_fallthru
      _
    %p54 = scmp.eq.s32.totalorder 0, 0
    // Predicated region
    $region26: #{tpu_custom_call.1} parent=1 // pred_check
      %p55 = pneg %p54
    $region27: #{tpu_custom_call.1} parent=1 // pred_check_branch
      %57 = sbr.rel (%p55) target = $region29
    $region28: #{tpu_custom_call.1} parent=1 // pred_region
      %vm58 = vcmask 0
      %59 = vst.msk [vmem:[#allocation8] sm:$0x1] %vm58, 0.0
      %60 = vst.msk [vmem:[#allocation9] sm:$0x1] %vm58, 0.0
      %61 = vst.msk [vmem:[#allocation11] sm:$0x1] %vm58, 0.0
    $region29: #{tpu_custom_call.1} parent=1 // pred_fallthru
      _
    %v62 = vld [vmem:[#allocation2] sm:$0xff]
    %v63 = vld [vmem:[#allocation2 + $0x8] sm:$0xff]
    %v64 = vld [vmem:[#allocation2 + $0x10] sm:$0xff]
    %v65 = vld [vmem:[#allocation2 + $0x18] sm:$0xff]
    %v66 = vld [vmem:[#allocation5] sm:$0xff]
    %v67 = vld [vmem:[#allocation5 + $0x8] sm:$0xff]
    %v68 = vld [vmem:[#allocation5 + $0x10] sm:$0xff]
    %v69 = vld [vmem:[#allocation5 + $0x18] sm:$0xff]
    %v70 = vld [vmem:[#allocation7] sm:$0xff]
    %v71 = vld [vmem:[#allocation7 + $0x8] sm:$0xff]
    %v72 = vld [vmem:[#allocation7 + $0x10] sm:$0xff]
    %v73 = vld [vmem:[#allocation7 + $0x18] sm:$0xff]
    %vm74 = vcmp.eq.f32.partialorder %v66, 1.0
    %vm75 = vcmp.eq.f32.partialorder %v67, 1.0
    %vm76 = vcmp.eq.f32.partialorder %v68, 1.0
    %vm77 = vcmp.eq.f32.partialorder %v69, 1.0
    %v78 = vsel %vm74, 1, 0
    %v79 = vsel %vm75, 1, 0
    %v80 = vsel %vm76, 1, 0
    %v81 = vsel %vm77, 1, 0
    %v82 = vcvt.s32.f32 %v78
    %v83 = vcvt.s32.f32 %v79
    %v84 = vcvt.s32.f32 %v80
    %v85 = vcvt.s32.f32 %v81
    %vm86 = vcmp.lt.f32.partialorder %v66, 1.0
    %vm87 = vcmp.lt.f32.partialorder %v67, 1.0
    %vm88 = vcmp.lt.f32.partialorder %v68, 1.0
    %vm89 = vcmp.lt.f32.partialorder %v69, 1.0
    %v90 = vsel %vm86, 1, 0
    %v91 = vsel %vm87, 1, 0
    %v92 = vsel %vm88, 1, 0
    %v93 = vsel %vm89, 1, 0
    %v94 = vcvt.s32.f32 %v90
    %v95 = vcvt.s32.f32 %v91
    %v96 = vcvt.s32.f32 %v92
    %v97 = vcvt.s32.f32 %v93
    %v98 = vsub.f32 1.0, %v66
    %v99 = vsub.f32 1.0, %v67
    %v100 = vsub.f32 1.0, %v68
    %v101 = vsub.f32 1.0, %v69
    %v102 = vmul.f32 %v98, %v98
    %v103 = vmul.f32 %v99, %v99
    %v104 = vmul.f32 %v100, %v100
    %v105 = vmul.f32 %v101, %v101
    %v106 = vmul.f32 %v102, %v102
    %v107 = vmul.f32 %v103, %v103
    %v108 = vmul.f32 %v104, %v104
    %v109 = vmul.f32 %v105, %v105
    %v110 = vadd.f32 %v62, 1e-07
    %v111 = vadd.f32 %v63, 1e-07
    %v112 = vadd.f32 %v64, 1e-07
    %v113 = vadd.f32 %v65, 1e-07
    %v114 = vlog2.pop %v110
    %v115 = vmul.f32 %v114, 0.6931472
    %v116 = vlog2.pop %v111
    %v117 = vmul.f32 %v116, 0.6931472
    %v118 = vlog2.pop %v112
    %v119 = vmul.f32 %v118, 0.6931472
    %v120 = vlog2.pop %v113
    %v121 = vmul.f32 %v120, 0.6931472
    %v122 = vsub.f32 1.0, %v62
    %v123 = vsub.f32 1.0, %v63
    %v124 = vsub.f32 1.0, %v64
    %v125 = vsub.f32 1.0, %v65
    %v126 = vmul.f32 %v122, %v122
    %v127 = vmul.f32 %v123, %v123
    %v128 = vmul.f32 %v124, %v124
    %v129 = vmul.f32 %v125, %v125
    %v130 = vmul.f32 %v115, %v126
    %v131 = vmul.f32 %v117, %v127
    %v132 = vmul.f32 %v119, %v128
    %v133 = vmul.f32 %v121, %v129
    %v134 = vmul.f32 %v130, %v82
    %v135 = vmul.f32 %v131, %v83
    %v136 = vmul.f32 %v132, %v84
    %v137 = vmul.f32 %v133, %v85
    %v138 = vmul.f32 %v134, %v70
    %v139 = vmul.f32 %v135, %v71
    %v140 = vmul.f32 %v136, %v72
    %v141 = vmul.f32 %v137, %v73
    %v142 = vadd.f32 %v122, 1e-07
    %v143 = vadd.f32 %v123, 1e-07
    %v144 = vadd.f32 %v124, 1e-07
    %v145 = vadd.f32 %v125, 1e-07
    %v146 = vlog2.pop %v142
    %v147 = vmul.f32 %v146, 0.6931472
    %v148 = vlog2.pop %v143
    %v149 = vmul.f32 %v148, 0.6931472
    %v150 = vlog2.pop %v144
    %v151 = vmul.f32 %v150, 0.6931472
    %v152 = vlog2.pop %v145
    %v153 = vmul.f32 %v152, 0.6931472
    %v154 = vmul.f32 %v62, %v62
    %v155 = vmul.f32 %v63, %v63
    %v156 = vmul.f32 %v64, %v64
    %v157 = vmul.f32 %v65, %v65
    %v158 = vmul.f32 %v147, %v154
    %v159 = vmul.f32 %v149, %v155
    %v160 = vmul.f32 %v151, %v156
    %v161 = vmul.f32 %v153, %v157
    %v162 = vmul.f32 %v158, %v106
    %v163 = vmul.f32 %v159, %v107
    %v164 = vmul.f32 %v160, %v108
    %v165 = vmul.f32 %v161, %v109
    %v166 = vmul.f32 %v162, %v94
    %v167 = vmul.f32 %v163, %v95
    %v168 = vmul.f32 %v164, %v96
    %v169 = vmul.f32 %v165, %v97
    %v170 = vmul.f32 %v166, %v70
    %v171 = vmul.f32 %v167, %v71
    %v172 = vmul.f32 %v168, %v72
    %v173 = vmul.f32 %v169, %v73
    %v174 = vld [vmem:[#allocation8] sm:$0x1]
    %v175 = vadd.f32 %v138, %v139
    %v176 = vadd.f32 %v175, %v140
    %v177 = vadd.f32 %v176, %v141
    %178 = vadd.xlane.f32.xlu0 %v177
    %v179 = vpop.xlane.xlu0 %178
    %v180 = vrot.slane %v179, 4
    %v181 = vadd.f32 %v179, %v180
    %v182 = vrot.slane %v181, 2
    %v183 = vadd.f32 %v181, %v182
    %v184 = vrot.slane %v183, 1
    %v185 = vadd.f32 %v183, %v184
    %s186 = vtos %v185
    %v187 = vstv %s186
    %v188 = vadd.f32 %v174, %v187
    %vm189 = vcmask 0
    %190 = vst.msk [vmem:[#allocation8] sm:$0x1] %vm189, %v188
    %v191 = vld [vmem:[#allocation9] sm:$0x1]
    %v192 = vadd.f32 %v170, %v171
    %v193 = vadd.f32 %v192, %v172
    %v194 = vadd.f32 %v193, %v173
    %195 = vadd.xlane.f32.xlu0 %v194
    %v196 = vpop.xlane.xlu0 %195
    %v197 = vrot.slane %v196, 4
    %v198 = vadd.f32 %v196, %v197
    %v199 = vrot.slane %v198, 2
    %v200 = vadd.f32 %v198, %v199
    %v201 = vrot.slane %v200, 1
    %v202 = vadd.f32 %v200, %v201
    %s203 = vtos %v202
    %v204 = vstv %s203
    %v205 = vadd.f32 %v191, %v204
    %206 = vst.msk [vmem:[#allocation9] sm:$0x1] %vm189, %v205
    %v207 = vld [vmem:[#allocation11] sm:$0x1]
    %v208 = vadd.f32 %v82, %v83
    %v209 = vadd.f32 %v208, %v84
    %v210 = vadd.f32 %v209, %v85
    %211 = vadd.xlane.f32.xlu0 %v210
    %v212 = vpop.xlane.xlu0 %211
    %v213 = vrot.slane %v212, 4
    %v214 = vadd.f32 %v212, %v213
    %v215 = vrot.slane %v214, 2
    %v216 = vadd.f32 %v214, %v215
    %v217 = vrot.slane %v216, 1
    %v218 = vadd.f32 %v216, %v217
    %s219 = vtos %v218
    %v220 = vstv %s219
    %v221 = vadd.f32 %v207, %v220
    %222 = vst.msk [vmem:[#allocation11] sm:$0x1] %vm189, %v221
    // Predicated region
    $region30: #{tpu_custom_call.1} parent=1 // pred_check
      _
    $region31: #{tpu_custom_call.1} parent=1 // pred_check_branch
      %224 = sbr.rel (0) target = $region33
    $region32: #{tpu_custom_call.1} parent=1 // pred_region
      %s226 = ssub.s32 16, 16
      %227 = vsyncadd [#allocation4], %s226
      %s229 = sshll.u32 [#allocation8], 4
      %s230 = int_to_ptr.vmem [resolvable:$true] %s229
      %232 = dma.vmem_to_hbm [thread:$0]  %s230, 16, %s3, [#allocation4]
    $region33: #{tpu_custom_call.1} parent=1 // pred_fallthru
      _
    // Predicated region
    $region34: #{tpu_custom_call.1} parent=1 // pred_check
      _
    $region35: #{tpu_custom_call.1} parent=1 // pred_check_branch
      %234 = sbr.rel (0) target = $region37
    $region36: #{tpu_custom_call.1} parent=1 // pred_region
      %s236 = ssub.s32 16, 16
      %237 = vsyncadd [#allocation10], %s236
      %s239 = sshll.u32 [#allocation9], 4
      %s240 = int_to_ptr.vmem [resolvable:$true] %s239
      %242 = dma.vmem_to_hbm [thread:$0]  %s240, 16, %s4, [#allocation10]
    $region37: #{tpu_custom_call.1} parent=1 // pred_fallthru
      _
    // Predicated region
    $region38: #{tpu_custom_call.1} parent=1 // pred_check
      _
    $region39: #{tpu_custom_call.1} parent=1 // pred_check_branch
      %244 = sbr.rel (0) target = $region41
    $region40: #{tpu_custom_call.1} parent=1 // pred_region
      %s246 = ssub.s32 16, 16
      %247 = vsyncadd [#allocation10], %s246
      %s249 = sshll.u32 [#allocation11], 4
      %s250 = int_to_ptr.vmem [resolvable:$true] %s249
      %252 = dma.vmem_to_hbm [thread:$0]  %s250, 16, %s5, [#allocation10]
    $region41: #{tpu_custom_call.1} parent=1 // pred_fallthru
      _
    // Predicated region
    $region42: #{tpu_custom_call.1} parent=1 // pred_check
      _
    $region43: #{tpu_custom_call.1} parent=1 // pred_check_branch
      %254 = sbr.rel (0) target = $region45
    $region44: #{tpu_custom_call.1} parent=1 // pred_region
      %255 = dma.done [#allocation4], 16
    $region45: #{tpu_custom_call.1} parent=1 // pred_fallthru
      _
    // Predicated region
    $region46: #{tpu_custom_call.1} parent=1 // pred_check
      _
    $region47: #{tpu_custom_call.1} parent=1 // pred_check_branch
      %257 = sbr.rel (0) target = $region49
    $region48: #{tpu_custom_call.1} parent=1 // pred_region
      %258 = dma.done [#allocation10], 16
    $region49: #{tpu_custom_call.1} parent=1 // pred_fallthru
      _
    // Predicated region
    $region50: #{tpu_custom_call.1} parent=1 // pred_check
      _
    $region51: #{tpu_custom_call.1} parent=1 // pred_check_branch
      %260 = sbr.rel (0) target = $region53
    $region52: #{tpu_custom_call.1} parent=1 // pred_region
      %261 = dma.done [#allocation10], 16
    $region53: #{tpu_custom_call.1} parent=1 // pred_fallthru
      _
    %262 = vsyncpa [#allocation3], 1
    %263 = vsyncpa [#allocation6], 1
    %264 = vsyncpa [#allocation4], 1
    %265 = vsyncpa [#allocation10], 1

</llo_original>
